<compile_context>
chip_gen: v6e
topology: v6e:2x2x1
jax: 0.10.0
libtpu: 0.0.40
codegen_flags: <defaults>
</compile_context>

<pallas_src>
import functools

import jax
import jax.numpy as jnp
from jax import lax
from jax.experimental import pallas as pl
from jax.experimental.pallas import tpu as pltpu


# ConvTranspose(k=4, s=2, p=1) parity decomposition:
#   out[2m+r, 2n+s] only receives kernel taps kh in _KH[r], kw in _KH[s],
#   reading y1[m + _DM[r][t], n + _DM[s][t]] (out-of-range -> 0).
_KH = ((1, 3), (0, 2))
_DM = ((0, -1), (1, 0))


def _unet_innermost_kernel(xph_ref, wd_ref, wu_ref, bd_ref, bu_ref, o_ref,
                           *, ho, wo, compute_dtype):
    """Fused innermost UnetBlock forward for ONE batch element.

    Layout: channels on sublanes, flattened space on lanes everywhere.

    xph_ref : (4, cin, Lin)  input spatial-parity phases of the zero-padded
              input, flattened row-major with row stride Wp = wo+1 (column
              index wo of each flat "row" is the phase boundary / junk col).
    wd_ref  : (inner, 16*cin)     K-fused down-conv weight, blocks (p, a, b)
    wu_ref  : (4, outer, 4*inner) K-fused ConvTranspose weight per out parity
    bd_ref  : (inner, 1);  bu_ref : (outer, 1)
    o_ref   : (4, outer+cin, Mp)  per-parity lane-dense output, Mp = ho*Wp
              (column j = wo of each output row is junk, dropped by wrapper).
    """
    Wp = wo + 1
    Mp = ho * Wp
    inner = wd_ref.shape[0]

    # ---- down: LeakyReLU(0.2) + Conv2d(k=4, s=2, p=1) as ONE K-fused dot ----
    down_slabs = []
    for p in range(4):
        xp32 = xph_ref[p].astype(jnp.float32)             # (cin, Lin)
        act = jnp.where(xp32 > 0, xp32, 0.2 * xp32)       # LeakyReLU in f32
        act = act.astype(compute_dtype)                   # MXU operand dtype
        for a in range(2):
            for b in range(2):
                off = a * Wp + b                          # lane shift of tap
                down_slabs.append(act[:, off:off + Mp])
    slab_d = jnp.concatenate(down_slabs, axis=0)          # (16*cin, Mp)
    y1 = jnp.dot(wd_ref[...], slab_d,
                 preferred_element_type=jnp.float32)      # (inner, Mp)
    y1 = jnp.maximum(y1 + bd_ref[...], 0.0)               # ReLU(conv + bias)
    y1c = y1.astype(compute_dtype)

    # ---- up: ReLU -> ConvTranspose2d(k=4, s=2, p=1), 4-phase, K-fused ------
    # Row shifts = +-Wp lanes into a zero-padded copy; column shifts = +-1 lane
    # with a (hoisted) mask that zeroes reads of the junk column.
    pad = Wp + 1
    zpad = jnp.zeros((inner, pad), compute_dtype)
    y1p = jnp.concatenate([zpad, y1c, zpad], axis=1)      # (inner, Mp + 2*pad)

    colmod = lax.broadcasted_iota(jnp.int32, (1, Mp), 1) % Wp
    mplus = (colmod < (wo - 1)).astype(compute_dtype)     # dn=+1 validity
    mminus = (colmod >= 1).astype(compute_dtype)          # dn=-1 validity

    taps = {}                                             # 9 distinct shifts
    for dm in (-1, 0, 1):
        for dn in (-1, 0, 1):
            start = pad + dm * Wp + dn
            t = y1p[:, start:start + Mp]                  # (inner, Mp)
            if dn == 1:
                t = t * mplus
            elif dn == -1:
                t = t * mminus
            taps[(dm, dn)] = t

    wu = wu_ref[...]
    bu = bu_ref[...]
    for ro in range(2):
        for so in range(2):
            po = 2 * ro + so
            slab_u = jnp.concatenate(
                [taps[(_DM[ro][tr], _DM[so][ts])]
                 for tr in range(2) for ts in range(2)], axis=0)  # (4*inner, Mp)
            up = jnp.dot(wu[po], slab_u,
                         preferred_element_type=jnp.float32) + bu  # (outer, Mp)
            # skip channels of the same output parity, re-read from the input
            # ref on demand (raw x, no LeakyReLU).
            p_skip = 2 * (1 - ro) + (1 - so)
            sk = ro * Wp + so
            skip = xph_ref[p_skip, :, sk:sk + Mp].astype(jnp.float32)
            o_ref[po] = jnp.concatenate([up, skip], axis=0).astype(o_ref.dtype)


def unet_block_innermost(x_nchw, params, *, compute_dtype=jnp.bfloat16):
    """forward(x) = cat([ConvT(ReLU(Conv(LeakyReLU(x)))), x], dim=1), NCHW."""
    w_down, b_down = params["w_down"], params["b_down"]
    w_up, b_up = params["w_up"], params["b_up"]
    n, cin, h, w = x_nchw.shape
    assert h % 2 == 0 and w % 2 == 0, "stride-2 block needs even H, W"
    inner_nc = w_down.shape[0]
    outer_nc = w_up.shape[1]
    ho, wo = h // 2, w // 2
    Hp, Wp = ho + 1, wo + 1
    Mp = ho * Wp                                  # per-phase flat length
    c_total = outer_nc + cin
    in_dtype = (jnp.float32 if jnp.dtype(compute_dtype) == jnp.dtype(jnp.float32)
                else jnp.bfloat16)

    # flat phase length: slices reach Hp*Wp + 1; round up to a lane multiple.
    Lin = ((Hp * Wp + 1 + 127) // 128) * 128

    # -- O(input)-sized XLA glue: zero-pad 1, split into 4 spatial parity
    #    phases, flatten each phase row-major (stride Wp), pad to Lin lanes.
    x_c = x_nchw.astype(in_dtype)
    xpad = jnp.pad(x_c, ((0, 0), (0, 0), (1, 1), (1, 1)))
    phases = []
    for r in range(2):
        for s in range(2):
            ph = xpad[:, :, r::2, s::2].reshape(n, cin, Hp * Wp)
            phases.append(jnp.pad(ph, ((0, 0), (0, 0), (0, Lin - Hp * Wp))))
    xph = jnp.stack(phases, axis=1)                       # (n, 4, cin, Lin)

    # -- K-fused down-conv weight (inner, 16*cin), column blocks in (p, a, b)
    #    order matching the in-kernel slab concatenation.
    wd_cols = []
    for r in range(2):
        for s in range(2):
            for a in range(2):
                for b in range(2):
                    wd_cols.append(w_down[:, :, 2 * a + r, 2 * b + s])
    wd_flip = jnp.concatenate(wd_cols, axis=1).astype(compute_dtype)

    # -- K-fused up weights per output parity: (4, outer, 4*inner).
    wu_list = []
    for ro in range(2):
        for so in range(2):
            blocks = [jnp.transpose(w_up[:, :, _KH[ro][tr], _KH[so][ts]], (1, 0))
                      for tr in range(2) for ts in range(2)]
            wu_list.append(jnp.concatenate(blocks, axis=1))
    wu_flip = jnp.stack(wu_list).astype(compute_dtype)

    bd = b_down.reshape(inner_nc, 1).astype(jnp.float32)
    bu = b_up.reshape(outer_nc, 1).astype(jnp.float32)

    kernel = functools.partial(_unet_innermost_kernel, ho=ho, wo=wo,
                               compute_dtype=compute_dtype)

    # -- VMEM budget derived from actual block sizes (double-buffered inputs /
    #    outputs + in-kernel slabs, 4x headroom), clamped so it is valid on
    #    v7x (64 MiB physical).  v5e/v6e could go higher before spatial tiling.
    itm_in = jnp.dtype(in_dtype).itemsize
    itm_c = jnp.dtype(compute_dtype).itemsize
    block_in = 4 * cin * Lin * itm_in
    block_out = 4 * c_total * Mp * 4
    weights_b = (wd_flip.size + wu_flip.size) * itm_c + (bd.size + bu.size) * 4
    scratch_b = (16 * cin + 14 * inner_nc + 8 * outer_nc + 4 * cin) * Mp * 4
    vmem_need = 2 * (block_in + block_out + weights_b) + 2 * scratch_b
    vmem_limit = int(min(max(4 * vmem_need, 32 * 2 ** 20), 64 * 2 ** 20))

    out_flat = pl.pallas_call(
        kernel,
        out_shape=jax.ShapeDtypeStruct((n, 4, c_total, Mp), jnp.float32),
        grid_spec=pltpu.PrefetchScalarGridSpec(
            num_scalar_prefetch=0,
            grid=(n,),                                    # one step per batch
            in_specs=[
                pl.BlockSpec((None, 4, cin, Lin), lambda i: (i, 0, 0, 0)),
                pl.BlockSpec((inner_nc, 16 * cin), lambda i: (0, 0)),
                pl.BlockSpec((4, outer_nc, 4 * inner_nc), lambda i: (0, 0, 0)),
                pl.BlockSpec((inner_nc, 1), lambda i: (0, 0)),
                pl.BlockSpec((outer_nc, 1), lambda i: (0, 0)),
            ],
            out_specs=pl.BlockSpec((None, 4, c_total, Mp),
                                   lambda i: (i, 0, 0, 0)),
        ),
        compiler_params=pltpu.CompilerParams(
            dimension_semantics=("parallel",),            # batch across TCs
            vmem_limit_bytes=vmem_limit),
    )(xph, wd_flip, wu_flip, bd, bu)

    # -- tiny XLA de-interleave back to NCHW, dropping the junk column j = wo.
    out = out_flat.reshape(n, 2, 2, c_total, ho, Wp)[..., :wo]
    out = jnp.transpose(out, (0, 3, 4, 1, 5, 2)).reshape(n, c_total, h, w)
    return out


# ----------------------------------------------------------------------------
# Pure-JAX reference (for correctness check)
# ----------------------------------------------------------------------------
def unet_block_innermost_ref(x, params):
    w_down, b_down, w_up, b_up = (params["w_down"], params["b_down"],
                                  params["w_up"], params["b_up"])
    a = jnp.where(x > 0, x, 0.2 * x)
    y1 = lax.conv_general_dilated(
        a, w_down, window_strides=(2, 2), padding=((1, 1), (1, 1)),
        dimension_numbers=("NCHW", "OIHW", "NCHW")) + b_down[None, :, None, None]
    r = jnp.maximum(y1, 0.0)
    w_up_conv = jnp.transpose(w_up, (1, 0, 2, 3))[:, :, ::-1, ::-1]
    y2 = lax.conv_general_dilated(
        r, w_up_conv, window_strides=(1, 1), padding=((2, 2), (2, 2)),
        lhs_dilation=(2, 2),
        dimension_numbers=("NCHW", "OIHW", "NCHW")) + b_up[None, :, None, None]
    return jnp.concatenate([y2, x], axis=1)


if __name__ == "__main__":
    input_nc, inner_nc, outer_nc = 4, 8, 4
    N, H, W = 2, 16, 16

    key = jax.random.PRNGKey(0)
    k1, k2, k3, k4, k5 = jax.random.split(key, 5)
    params = {
        # Conv2d(input_nc -> inner_nc, k=4): weight (inner, input, 4, 4)
        "w_down": 0.1 * jax.random.normal(k1, (inner_nc, input_nc, 4, 4),
                                          jnp.float32),
        "b_down": 0.1 * jax.random.normal(k2, (inner_nc,), jnp.float32),
        # ConvTranspose2d(inner_nc -> outer_nc, k=4): weight (inner, outer, 4, 4)
        "w_up": 0.1 * jax.random.normal(k3, (inner_nc, outer_nc, 4, 4),
                                        jnp.float32),
        "b_up": 0.1 * jax.random.normal(k4, (outer_nc,), jnp.float32),
    }
    x = jax.random.normal(k5, (N, input_nc, H, W), jnp.float32)

    fwd_bf16 = jax.jit(functools.partial(unet_block_innermost,
                                         compute_dtype=jnp.bfloat16))
    fwd_f32 = jax.jit(functools.partial(unet_block_innermost,
                                        compute_dtype=jnp.float32))

    out_bf16 = jax.block_until_ready(fwd_bf16(x, params))
    out_f32 = jax.block_until_ready(fwd_f32(x, params))
    ref = jax.block_until_ready(unet_block_innermost_ref(x, params))

    assert out_bf16.shape == (N, outer_nc + input_nc, H, W), out_bf16.shape
    assert out_f32.shape == (N, outer_nc + input_nc, H, W), out_f32.shape
    # f32 path: tight check of the fused structure / parity bookkeeping.
    assert jnp.allclose(out_f32, ref, atol=1e-4, rtol=1e-4), \
        float(jnp.max(jnp.abs(out_f32 - ref)))
    # bf16 path (default): bf16 input / operand quantization level tolerance.
    assert jnp.allclose(out_bf16, ref, atol=3e-2, rtol=3e-2), \
        float(jnp.max(jnp.abs(out_bf16 - ref)))
    print("KERNEL_OK")
</pallas_src>

<mosaic_0001>
module attributes {stable_mosaic.version = 11 : i64} {
  func.func @_unet_innermost_kernel(%arg0: i32, %arg1: memref<1x4x4x128xbf16, #tpu.memory_space<vmem>>, %arg2: memref<8x64xbf16, #tpu.memory_space<vmem>>, %arg3: memref<4x4x32xbf16, #tpu.memory_space<vmem>>, %arg4: memref<8x1xf32, #tpu.memory_space<vmem>>, %arg5: memref<4x1xf32, #tpu.memory_space<vmem>>, %arg6: memref<1x4x8x72xf32, #tpu.memory_space<vmem>>) attributes {dimension_semantics = [#tpu.dimension_semantics<parallel>], iteration_bounds = array<i64: 2>, scalar_prefetch = 0 : i64, scratch_operands = 0 : i64, tpu.core_type = #tpu.core_type<tc>, window_params = [{transform_indices = @transform_0, window_bounds = array<i64: 1, 4, 4, 128>}, {pipeline_mode = #tpu.pipeline_mode<synchronous>, transform_indices = @transform_1, window_bounds = array<i64: 8, 64>}, {pipeline_mode = #tpu.pipeline_mode<synchronous>, transform_indices = @transform_2, window_bounds = array<i64: 4, 4, 32>}, {pipeline_mode = #tpu.pipeline_mode<synchronous>, transform_indices = @transform_3, window_bounds = array<i64: 8, 1>}, {pipeline_mode = #tpu.pipeline_mode<synchronous>, transform_indices = @transform_4, window_bounds = array<i64: 4, 1>}, {transform_indices = @transform_5, window_bounds = array<i64: 1, 4, 8, 72>}]} {
    %c0 = arith.constant 0 : index
    %c0_0 = arith.constant 0 : index
    %c0_1 = arith.constant 0 : index
    %c0_2 = arith.constant 0 : index
    %0 = vector.load %arg1[%c0, %c0_0, %c0_1, %c0_2] : memref<1x4x4x128xbf16, #tpu.memory_space<vmem>>, vector<1x1x4x128xbf16>
    %1 = vector.shape_cast %0 : vector<1x1x4x128xbf16> to vector<4x128xbf16>
    %2 = arith.extf %1 : vector<4x128xbf16> to vector<4x128xf32>
    %cst = arith.constant 0.000000e+00 : f32
    %3 = vector.broadcast %cst : f32 to vector<4x128xf32>
    %4 = arith.cmpf ogt, %2, %3 : vector<4x128xf32>
    %cst_3 = arith.constant 2.000000e-01 : f32
    %5 = vector.broadcast %cst_3 : f32 to vector<4x128xf32>
    %6 = arith.mulf %5, %2 : vector<4x128xf32>
    %7 = arith.select %4, %2, %6 : vector<4x128xi1>, vector<4x128xf32>
    %8 = arith.truncf %7 : vector<4x128xf32> to vector<4x128xbf16>
    %9 = vector.extract_strided_slice %8 {offsets = [0, 0], sizes = [4, 72], strides = [1, 1]} : vector<4x128xbf16> to vector<4x72xbf16>
    %10 = vector.extract_strided_slice %8 {offsets = [0, 1], sizes = [4, 72], strides = [1, 1]} : vector<4x128xbf16> to vector<4x72xbf16>
    %11 = vector.extract_strided_slice %8 {offsets = [0, 9], sizes = [4, 72], strides = [1, 1]} : vector<4x128xbf16> to vector<4x72xbf16>
    %12 = vector.extract_strided_slice %8 {offsets = [0, 10], sizes = [4, 72], strides = [1, 1]} : vector<4x128xbf16> to vector<4x72xbf16>
    %c0_4 = arith.constant 0 : index
    %c1 = arith.constant 1 : index
    %c0_5 = arith.constant 0 : index
    %c0_6 = arith.constant 0 : index
    %13 = vector.load %arg1[%c0_4, %c1, %c0_5, %c0_6] : memref<1x4x4x128xbf16, #tpu.memory_space<vmem>>, vector<1x1x4x128xbf16>
    %14 = vector.shape_cast %13 : vector<1x1x4x128xbf16> to vector<4x128xbf16>
    %15 = arith.extf %14 : vector<4x128xbf16> to vector<4x128xf32>
    %cst_7 = arith.constant 0.000000e+00 : f32
    %16 = vector.broadcast %cst_7 : f32 to vector<4x128xf32>
    %17 = arith.cmpf ogt, %15, %16 : vector<4x128xf32>
    %cst_8 = arith.constant 2.000000e-01 : f32
    %18 = vector.broadcast %cst_8 : f32 to vector<4x128xf32>
    %19 = arith.mulf %18, %15 : vector<4x128xf32>
    %20 = arith.select %17, %15, %19 : vector<4x128xi1>, vector<4x128xf32>
    %21 = arith.truncf %20 : vector<4x128xf32> to vector<4x128xbf16>
    %22 = vector.extract_strided_slice %21 {offsets = [0, 0], sizes = [4, 72], strides = [1, 1]} : vector<4x128xbf16> to vector<4x72xbf16>
    %23 = vector.extract_strided_slice %21 {offsets = [0, 1], sizes = [4, 72], strides = [1, 1]} : vector<4x128xbf16> to vector<4x72xbf16>
    %24 = vector.extract_strided_slice %21 {offsets = [0, 9], sizes = [4, 72], strides = [1, 1]} : vector<4x128xbf16> to vector<4x72xbf16>
    %25 = vector.extract_strided_slice %21 {offsets = [0, 10], sizes = [4, 72], strides = [1, 1]} : vector<4x128xbf16> to vector<4x72xbf16>
    %c0_9 = arith.constant 0 : index
    %c2 = arith.constant 2 : index
    %c0_10 = arith.constant 0 : index
    %c0_11 = arith.constant 0 : index
    %26 = vector.load %arg1[%c0_9, %c2, %c0_10, %c0_11] : memref<1x4x4x128xbf16, #tpu.memory_space<vmem>>, vector<1x1x4x128xbf16>
    %27 = vector.shape_cast %26 : vector<1x1x4x128xbf16> to vector<4x128xbf16>
    %28 = arith.extf %27 : vector<4x128xbf16> to vector<4x128xf32>
    %cst_12 = arith.constant 0.000000e+00 : f32
    %29 = vector.broadcast %cst_12 : f32 to vector<4x128xf32>
    %30 = arith.cmpf ogt, %28, %29 : vector<4x128xf32>
    %cst_13 = arith.constant 2.000000e-01 : f32
    %31 = vector.broadcast %cst_13 : f32 to vector<4x128xf32>
    %32 = arith.mulf %31, %28 : vector<4x128xf32>
    %33 = arith.select %30, %28, %32 : vector<4x128xi1>, vector<4x128xf32>
    %34 = arith.truncf %33 : vector<4x128xf32> to vector<4x128xbf16>
    %35 = vector.extract_strided_slice %34 {offsets = [0, 0], sizes = [4, 72], strides = [1, 1]} : vector<4x128xbf16> to vector<4x72xbf16>
    %36 = vector.extract_strided_slice %34 {offsets = [0, 1], sizes = [4, 72], strides = [1, 1]} : vector<4x128xbf16> to vector<4x72xbf16>
    %37 = vector.extract_strided_slice %34 {offsets = [0, 9], sizes = [4, 72], strides = [1, 1]} : vector<4x128xbf16> to vector<4x72xbf16>
    %38 = vector.extract_strided_slice %34 {offsets = [0, 10], sizes = [4, 72], strides = [1, 1]} : vector<4x128xbf16> to vector<4x72xbf16>
    %c0_14 = arith.constant 0 : index
    %c3 = arith.constant 3 : index
    %c0_15 = arith.constant 0 : index
    %c0_16 = arith.constant 0 : index
    %39 = vector.load %arg1[%c0_14, %c3, %c0_15, %c0_16] : memref<1x4x4x128xbf16, #tpu.memory_space<vmem>>, vector<1x1x4x128xbf16>
    %40 = vector.shape_cast %39 : vector<1x1x4x128xbf16> to vector<4x128xbf16>
    %41 = arith.extf %40 : vector<4x128xbf16> to vector<4x128xf32>
    %cst_17 = arith.constant 0.000000e+00 : f32
    %42 = vector.broadcast %cst_17 : f32 to vector<4x128xf32>
    %43 = arith.cmpf ogt, %41, %42 : vector<4x128xf32>
    %cst_18 = arith.constant 2.000000e-01 : f32
    %44 = vector.broadcast %cst_18 : f32 to vector<4x128xf32>
    %45 = arith.mulf %44, %41 : vector<4x128xf32>
    %46 = arith.select %43, %41, %45 : vector<4x128xi1>, vector<4x128xf32>
    %47 = arith.truncf %46 : vector<4x128xf32> to vector<4x128xbf16>
    %48 = vector.extract_strided_slice %47 {offsets = [0, 0], sizes = [4, 72], strides = [1, 1]} : vector<4x128xbf16> to vector<4x72xbf16>
    %49 = vector.extract_strided_slice %47 {offsets = [0, 1], sizes = [4, 72], strides = [1, 1]} : vector<4x128xbf16> to vector<4x72xbf16>
    %50 = vector.extract_strided_slice %47 {offsets = [0, 9], sizes = [4, 72], strides = [1, 1]} : vector<4x128xbf16> to vector<4x72xbf16>
    %51 = vector.extract_strided_slice %47 {offsets = [0, 10], sizes = [4, 72], strides = [1, 1]} : vector<4x128xbf16> to vector<4x72xbf16>
    %52 = tpu.concatenate %9, %10, %11, %12, %22, %23, %24, %25, %35, %36, %37, %38, %48, %49, %50, %51 in 0 : vector<4x72xbf16>, vector<4x72xbf16>, vector<4x72xbf16>, vector<4x72xbf16>, vector<4x72xbf16>, vector<4x72xbf16>, vector<4x72xbf16>, vector<4x72xbf16>, vector<4x72xbf16>, vector<4x72xbf16>, vector<4x72xbf16>, vector<4x72xbf16>, vector<4x72xbf16>, vector<4x72xbf16>, vector<4x72xbf16>, vector<4x72xbf16> -> vector<64x72xbf16>
    %c0_19 = arith.constant 0 : index
    %c0_20 = arith.constant 0 : index
    %53 = vector.load %arg2[%c0_19, %c0_20] : memref<8x64xbf16, #tpu.memory_space<vmem>>, vector<8x64xbf16>
    %cst_21 = arith.constant dense<0.000000e+00> : vector<8x72xf32>
    %54 = tpu.matmul %53, %52, %cst_21 {dimension_numbers = #tpu.dot_dimension_numbers<[1], [0], [0], [1], [0, 0, 1, 1], [], []>} : vector<8x64xbf16>, vector<64x72xbf16>, vector<8x72xf32> -> vector<8x72xf32>
    %c0_22 = arith.constant 0 : index
    %c0_23 = arith.constant 0 : index
    %55 = vector.load %arg4[%c0_22, %c0_23] : memref<8x1xf32, #tpu.memory_space<vmem>>, vector<8x1xf32>
    %56 = vector.broadcast %55 : vector<8x1xf32> to vector<8x72xf32>
    %57 = arith.addf %54, %56 : vector<8x72xf32>
    %cst_24 = arith.constant 0.000000e+00 : f32
    %58 = vector.broadcast %cst_24 : f32 to vector<8x72xf32>
    %59 = arith.maximumf %57, %58 : vector<8x72xf32>
    %60 = arith.truncf %59 : vector<8x72xf32> to vector<8x72xbf16>
    %cst_25 = arith.constant 0.000000e+00 : bf16
    %61 = vector.broadcast %cst_25 : bf16 to vector<8x10xbf16>
    %62 = tpu.concatenate %61, %60, %61 in 1 : vector<8x10xbf16>, vector<8x72xbf16>, vector<8x10xbf16> -> vector<8x92xbf16>
    %63 = tpu.iota {dimensions = array<i32: 1>} : vector<1x72xi32>
    %c9_i32 = arith.constant 9 : i32
    %c0_i32 = arith.constant 0 : i32
    %64 = arith.cmpi eq, %c9_i32, %c0_i32 : i32
    %c1_i32 = arith.constant 1 : i32
    %65 = arith.select %64, %c1_i32, %c9_i32 : i32
    %66 = vector.broadcast %65 : i32 to vector<1x72xi32>
    %67 = arith.remsi %63, %66 : vector<1x72xi32>
    %c0_i32_26 = arith.constant 0 : i32
    %68 = vector.broadcast %c0_i32_26 : i32 to vector<1x72xi32>
    %69 = arith.cmpi ne, %67, %68 : vector<1x72xi32>
    %c0_i32_27 = arith.constant 0 : i32
    %70 = vector.broadcast %c0_i32_27 : i32 to vector<1x72xi32>
    %71 = arith.cmpi slt, %67, %70 : vector<1x72xi32>
    %c0_i32_28 = arith.constant 0 : i32
    %72 = arith.cmpi slt, %65, %c0_i32_28 : i32
    %73 = vector.broadcast %72 : i1 to vector<1x72xi1>
    %74 = vector.broadcast %73 : vector<1x72xi1> to vector<1x72xi1>
    %75 = arith.xori %71, %74 : vector<1x72xi1>
    %76 = arith.andi %75, %69 : vector<1x72xi1>
    %77 = vector.broadcast %65 : i32 to vector<1x72xi32>
    %78 = arith.addi %67, %77 : vector<1x72xi32>
    %79 = arith.select %76, %78, %67 : vector<1x72xi1>, vector<1x72xi32>
    %c7_i32 = arith.constant 7 : i32
    %80 = vector.broadcast %c7_i32 : i32 to vector<1x72xi32>
    %81 = arith.cmpi slt, %79, %80 : vector<1x72xi32>
    %82 = arith.extui %81 : vector<1x72xi1> to vector<1x72xi32>
    %83 = arith.sitofp %82 : vector<1x72xi32> to vector<1x72xf32>
    %84 = arith.truncf %83 : vector<1x72xf32> to vector<1x72xbf16>
    %c1_i32_29 = arith.constant 1 : i32
    %85 = vector.broadcast %c1_i32_29 : i32 to vector<1x72xi32>
    %86 = arith.cmpi sge, %79, %85 : vector<1x72xi32>
    %87 = arith.extui %86 : vector<1x72xi1> to vector<1x72xi32>
    %88 = arith.sitofp %87 : vector<1x72xi32> to vector<1x72xf32>
    %89 = arith.truncf %88 : vector<1x72xf32> to vector<1x72xbf16>
    %90 = vector.extract_strided_slice %62 {offsets = [0, 0], sizes = [8, 72], strides = [1, 1]} : vector<8x92xbf16> to vector<8x72xbf16>
    %91 = vector.broadcast %89 : vector<1x72xbf16> to vector<8x72xbf16>
    %92 = arith.mulf %90, %91 : vector<8x72xbf16>
    %93 = vector.extract_strided_slice %62 {offsets = [0, 1], sizes = [8, 72], strides = [1, 1]} : vector<8x92xbf16> to vector<8x72xbf16>
    %94 = vector.extract_strided_slice %62 {offsets = [0, 2], sizes = [8, 72], strides = [1, 1]} : vector<8x92xbf16> to vector<8x72xbf16>
    %95 = vector.broadcast %84 : vector<1x72xbf16> to vector<8x72xbf16>
    %96 = arith.mulf %94, %95 : vector<8x72xbf16>
    %97 = vector.extract_strided_slice %62 {offsets = [0, 9], sizes = [8, 72], strides = [1, 1]} : vector<8x92xbf16> to vector<8x72xbf16>
    %98 = vector.broadcast %89 : vector<1x72xbf16> to vector<8x72xbf16>
    %99 = arith.mulf %97, %98 : vector<8x72xbf16>
    %100 = vector.extract_strided_slice %62 {offsets = [0, 10], sizes = [8, 72], strides = [1, 1]} : vector<8x92xbf16> to vector<8x72xbf16>
    %101 = vector.extract_strided_slice %62 {offsets = [0, 11], sizes = [8, 72], strides = [1, 1]} : vector<8x92xbf16> to vector<8x72xbf16>
    %102 = vector.broadcast %84 : vector<1x72xbf16> to vector<8x72xbf16>
    %103 = arith.mulf %101, %102 : vector<8x72xbf16>
    %104 = vector.extract_strided_slice %62 {offsets = [0, 18], sizes = [8, 72], strides = [1, 1]} : vector<8x92xbf16> to vector<8x72xbf16>
    %105 = vector.broadcast %89 : vector<1x72xbf16> to vector<8x72xbf16>
    %106 = arith.mulf %104, %105 : vector<8x72xbf16>
    %107 = vector.extract_strided_slice %62 {offsets = [0, 19], sizes = [8, 72], strides = [1, 1]} : vector<8x92xbf16> to vector<8x72xbf16>
    %108 = vector.extract_strided_slice %62 {offsets = [0, 20], sizes = [8, 72], strides = [1, 1]} : vector<8x92xbf16> to vector<8x72xbf16>
    %109 = vector.broadcast %84 : vector<1x72xbf16> to vector<8x72xbf16>
    %110 = arith.mulf %108, %109 : vector<8x72xbf16>
    %c0_30 = arith.constant 0 : index
    %c0_31 = arith.constant 0 : index
    %c0_32 = arith.constant 0 : index
    %111 = vector.load %arg3[%c0_30, %c0_31, %c0_32] : memref<4x4x32xbf16, #tpu.memory_space<vmem>>, vector<4x4x32xbf16>
    %c0_33 = arith.constant 0 : index
    %c0_34 = arith.constant 0 : index
    %112 = vector.load %arg5[%c0_33, %c0_34] : memref<4x1xf32, #tpu.memory_space<vmem>>, vector<4x1xf32>
    %113 = tpu.concatenate %100, %99, %93, %92 in 0 : vector<8x72xbf16>, vector<8x72xbf16>, vector<8x72xbf16>, vector<8x72xbf16> -> vector<32x72xbf16>
    %114 = vector.extract_strided_slice %111 {offsets = [0, 0, 0], sizes = [1, 4, 32], strides = [1, 1, 1]} : vector<4x4x32xbf16> to vector<1x4x32xbf16>
    %115 = vector.shape_cast %114 : vector<1x4x32xbf16> to vector<4x32xbf16>
    %cst_35 = arith.constant dense<0.000000e+00> : vector<4x72xf32>
    %116 = tpu.matmul %115, %113, %cst_35 {dimension_numbers = #tpu.dot_dimension_numbers<[1], [0], [0], [1], [0, 0, 1, 1], [], []>} : vector<4x32xbf16>, vector<32x72xbf16>, vector<4x72xf32> -> vector<4x72xf32>
    %117 = vector.broadcast %112 : vector<4x1xf32> to vector<4x72xf32>
    %118 = arith.addf %116, %117 : vector<4x72xf32>
    %c0_36 = arith.constant 0 : index
    %c3_37 = arith.constant 3 : index
    %c0_38 = arith.constant 0 : index
    %c0_39 = arith.constant 0 : index
    %119 = vector.load %arg1[%c0_36, %c3_37, %c0_38, %c0_39] : memref<1x4x4x128xbf16, #tpu.memory_space<vmem>>, vector<1x1x4x72xbf16>
    %120 = vector.shape_cast %119 : vector<1x1x4x72xbf16> to vector<4x72xbf16>
    %121 = arith.extf %120 : vector<4x72xbf16> to vector<4x72xf32>
    %122 = tpu.concatenate %118, %121 in 0 : vector<4x72xf32>, vector<4x72xf32> -> vector<8x72xf32>
    %c0_40 = arith.constant 0 : index
    %c0_41 = arith.constant 0 : index
    %c0_42 = arith.constant 0 : index
    %c0_43 = arith.constant 0 : index
    %123 = vector.load %arg6[%c0_40, %c0_41, %c0_42, %c0_43] : memref<1x4x8x72xf32, #tpu.memory_space<vmem>>, vector<1x1x8x72xf32>
    %124 = vector.shape_cast %123 : vector<1x1x8x72xf32> to vector<8x72xf32>
    %125 = vector.shape_cast %122 : vector<8x72xf32> to vector<1x1x8x72xf32>
    tpu.vector_store %arg6[%c0_40, %c0_41, %c0_42, %c0_43], %125 {strides = array<i32>} : memref<1x4x8x72xf32, #tpu.memory_space<vmem>>, vector<1x1x8x72xf32>,
    %126 = tpu.concatenate %103, %100, %96, %93 in 0 : vector<8x72xbf16>, vector<8x72xbf16>, vector<8x72xbf16>, vector<8x72xbf16> -> vector<32x72xbf16>
    %127 = vector.extract_strided_slice %111 {offsets = [1, 0, 0], sizes = [1, 4, 32], strides = [1, 1, 1]} : vector<4x4x32xbf16> to vector<1x4x32xbf16>
    %128 = vector.shape_cast %127 : vector<1x4x32xbf16> to vector<4x32xbf16>
    %cst_44 = arith.constant dense<0.000000e+00> : vector<4x72xf32>
    %129 = tpu.matmul %128, %126, %cst_44 {dimension_numbers = #tpu.dot_dimension_numbers<[1], [0], [0], [1], [0, 0, 1, 1], [], []>} : vector<4x32xbf16>, vector<32x72xbf16>, vector<4x72xf32> -> vector<4x72xf32>
    %130 = vector.broadcast %112 : vector<4x1xf32> to vector<4x72xf32>
    %131 = arith.addf %129, %130 : vector<4x72xf32>
    %c0_45 = arith.constant 0 : index
    %c2_46 = arith.constant 2 : index
    %c0_47 = arith.constant 0 : index
    %c1_48 = arith.constant 1 : index
    %132 = vector.load %arg1[%c0_45, %c2_46, %c0_47, %c1_48] : memref<1x4x4x128xbf16, #tpu.memory_space<vmem>>, vector<1x1x4x72xbf16>
    %133 = vector.shape_cast %132 : vector<1x1x4x72xbf16> to vector<4x72xbf16>
    %134 = arith.extf %133 : vector<4x72xbf16> to vector<4x72xf32>
    %135 = tpu.concatenate %131, %134 in 0 : vector<4x72xf32>, vector<4x72xf32> -> vector<8x72xf32>
    %c0_49 = arith.constant 0 : index
    %c1_50 = arith.constant 1 : index
    %c0_51 = arith.constant 0 : index
    %c0_52 = arith.constant 0 : index
    %136 = vector.load %arg6[%c0_49, %c1_50, %c0_51, %c0_52] : memref<1x4x8x72xf32, #tpu.memory_space<vmem>>, vector<1x1x8x72xf32>
    %137 = vector.shape_cast %136 : vector<1x1x8x72xf32> to vector<8x72xf32>
    %138 = vector.shape_cast %135 : vector<8x72xf32> to vector<1x1x8x72xf32>
    tpu.vector_store %arg6[%c0_49, %c1_50, %c0_51, %c0_52], %138 {strides = array<i32>} : memref<1x4x8x72xf32, #tpu.memory_space<vmem>>, vector<1x1x8x72xf32>,
    %139 = tpu.concatenate %107, %106, %100, %99 in 0 : vector<8x72xbf16>, vector<8x72xbf16>, vector<8x72xbf16>, vector<8x72xbf16> -> vector<32x72xbf16>
    %140 = vector.extract_strided_slice %111 {offsets = [2, 0, 0], sizes = [1, 4, 32], strides = [1, 1, 1]} : vector<4x4x32xbf16> to vector<1x4x32xbf16>
    %141 = vector.shape_cast %140 : vector<1x4x32xbf16> to vector<4x32xbf16>
    %cst_53 = arith.constant dense<0.000000e+00> : vector<4x72xf32>
    %142 = tpu.matmul %141, %139, %cst_53 {dimension_numbers = #tpu.dot_dimension_numbers<[1], [0], [0], [1], [0, 0, 1, 1], [], []>} : vector<4x32xbf16>, vector<32x72xbf16>, vector<4x72xf32> -> vector<4x72xf32>
    %143 = vector.broadcast %112 : vector<4x1xf32> to vector<4x72xf32>
    %144 = arith.addf %142, %143 : vector<4x72xf32>
    %c0_54 = arith.constant 0 : index
    %c1_55 = arith.constant 1 : index
    %c0_56 = arith.constant 0 : index
    %c9 = arith.constant 9 : index
    %145 = vector.load %arg1[%c0_54, %c1_55, %c0_56, %c9] : memref<1x4x4x128xbf16, #tpu.memory_space<vmem>>, vector<1x1x4x72xbf16>
    %146 = vector.shape_cast %145 : vector<1x1x4x72xbf16> to vector<4x72xbf16>
    %147 = arith.extf %146 : vector<4x72xbf16> to vector<4x72xf32>
    %148 = tpu.concatenate %144, %147 in 0 : vector<4x72xf32>, vector<4x72xf32> -> vector<8x72xf32>
    %c0_57 = arith.constant 0 : index
    %c2_58 = arith.constant 2 : index
    %c0_59 = arith.constant 0 : index
    %c0_60 = arith.constant 0 : index
    %149 = vector.load %arg6[%c0_57, %c2_58, %c0_59, %c0_60] : memref<1x4x8x72xf32, #tpu.memory_space<vmem>>, vector<1x1x8x72xf32>
    %150 = vector.shape_cast %149 : vector<1x1x8x72xf32> to vector<8x72xf32>
    %151 = vector.shape_cast %148 : vector<8x72xf32> to vector<1x1x8x72xf32>
    tpu.vector_store %arg6[%c0_57, %c2_58, %c0_59, %c0_60], %151 {strides = array<i32>} : memref<1x4x8x72xf32, #tpu.memory_space<vmem>>, vector<1x1x8x72xf32>,
    %152 = tpu.concatenate %110, %107, %103, %100 in 0 : vector<8x72xbf16>, vector<8x72xbf16>, vector<8x72xbf16>, vector<8x72xbf16> -> vector<32x72xbf16>
    %153 = vector.extract_strided_slice %111 {offsets = [3, 0, 0], sizes = [1, 4, 32], strides = [1, 1, 1]} : vector<4x4x32xbf16> to vector<1x4x32xbf16>
    %154 = vector.shape_cast %153 : vector<1x4x32xbf16> to vector<4x32xbf16>
    %cst_61 = arith.constant dense<0.000000e+00> : vector<4x72xf32>
    %155 = tpu.matmul %154, %152, %cst_61 {dimension_numbers = #tpu.dot_dimension_numbers<[1], [0], [0], [1], [0, 0, 1, 1], [], []>} : vector<4x32xbf16>, vector<32x72xbf16>, vector<4x72xf32> -> vector<4x72xf32>
    %156 = vector.broadcast %112 : vector<4x1xf32> to vector<4x72xf32>
    %157 = arith.addf %155, %156 : vector<4x72xf32>
    %c0_62 = arith.constant 0 : index
    %c0_63 = arith.constant 0 : index
    %c0_64 = arith.constant 0 : index
    %c10 = arith.constant 10 : index
    %158 = vector.load %arg1[%c0_62, %c0_63, %c0_64, %c10] : memref<1x4x4x128xbf16, #tpu.memory_space<vmem>>, vector<1x1x4x72xbf16>
    %159 = vector.shape_cast %158 : vector<1x1x4x72xbf16> to vector<4x72xbf16>
    %160 = arith.extf %159 : vector<4x72xbf16> to vector<4x72xf32>
    %161 = tpu.concatenate %157, %160 in 0 : vector<4x72xf32>, vector<4x72xf32> -> vector<8x72xf32>
    %c0_65 = arith.constant 0 : index
    %c3_66 = arith.constant 3 : index
    %c0_67 = arith.constant 0 : index
    %c0_68 = arith.constant 0 : index
    %162 = vector.load %arg6[%c0_65, %c3_66, %c0_67, %c0_68] : memref<1x4x8x72xf32, #tpu.memory_space<vmem>>, vector<1x1x8x72xf32>
    %163 = vector.shape_cast %162 : vector<1x1x8x72xf32> to vector<8x72xf32>
    %164 = vector.shape_cast %161 : vector<8x72xf32> to vector<1x1x8x72xf32>
    tpu.vector_store %arg6[%c0_65, %c3_66, %c0_67, %c0_68], %164 {strides = array<i32>} : memref<1x4x8x72xf32, #tpu.memory_space<vmem>>, vector<1x1x8x72xf32>,
    return
  }
  func.func @transform_0(%arg0: i32) -> (i32, i32, i32, i32) {
    %c0_i32 = arith.constant 0 : i32
    %c0_i32_0 = arith.constant 0 : i32
    %c0_i32_1 = arith.constant 0 : i32
    %c0_i32_2 = arith.constant 0 : i32
    return %arg0, %c0_i32, %c0_i32_0, %c0_i32_1 : i32, i32, i32, i32
  }
  func.func @transform_1(%arg0: i32) -> (i32, i32) {
    %c0_i32 = arith.constant 0 : i32
    %c0_i32_0 = arith.constant 0 : i32
    %c0_i32_1 = arith.constant 0 : i32
    return %c0_i32, %c0_i32_0 : i32, i32
  }
  func.func @transform_2(%arg0: i32) -> (i32, i32, i32) {
    %c0_i32 = arith.constant 0 : i32
    %c0_i32_0 = arith.constant 0 : i32
    %c0_i32_1 = arith.constant 0 : i32
    %c0_i32_2 = arith.constant 0 : i32
    return %c0_i32, %c0_i32_0, %c0_i32_1 : i32, i32, i32
  }
  func.func @transform_3(%arg0: i32) -> (i32, i32) {
    %c0_i32 = arith.constant 0 : i32
    %c0_i32_0 = arith.constant 0 : i32
    %c0_i32_1 = arith.constant 0 : i32
    return %c0_i32, %c0_i32_0 : i32, i32
  }
  func.func @transform_4(%arg0: i32) -> (i32, i32) {
    %c0_i32 = arith.constant 0 : i32
    %c0_i32_0 = arith.constant 0 : i32
    %c0_i32_1 = arith.constant 0 : i32
    return %c0_i32, %c0_i32_0 : i32, i32
  }
  func.func @transform_5(%arg0: i32) -> (i32, i32, i32, i32) {
    %c0_i32 = arith.constant 0 : i32
    %c0_i32_0 = arith.constant 0 : i32
    %c0_i32_1 = arith.constant 0 : i32
    %c0_i32_2 = arith.constant 0 : i32
    return %arg0, %c0_i32, %c0_i32_0, %c0_i32_1 : i32, i32, i32, i32
  }
}

</mosaic_0001>

<llo_original>
// kernel: unet_block_innermost.1
$region0: #{unet_block_innermost.1}
  #allocation0 [shape = 'u32[]', space=smem, size = 0x4, offset = 0x4, fixed_abs, tag = 'smem constant byte address 0x4 - core index']
  #allocation1 [shape = 'u32[144,128]{1,0:T(1,128)}', space=vmem, size = 0x12000, scoped, tag = 'internal scratch']
  %s0 = inlined_call_operand.vmem [shape: bf16[2,4,4,128], index: 0, kind: input, shape index: {}]
  %s1 = inlined_call_operand.vmem [shape: bf16[8,64], index: 1, kind: input, shape index: {}]
  %s2 = inlined_call_operand.vmem [shape: bf16[4,4,32], index: 2, kind: input, shape index: {}]
  %s3 = inlined_call_operand.vmem [shape: f32[8,1], index: 3, kind: input, shape index: {}]
  %s4 = inlined_call_operand.vmem [shape: f32[4,1], index: 4, kind: input, shape index: {}]
  %s5 = inlined_call_operand.vmem [shape: f32[2,4,8,72], index: 5, kind: output, shape index: {}]
  %s6 = sld [smem:[#allocation0]]
  $region53: #{unet_block_innermost.1} parent=0
    _
  %s8 = ssub.s32 1, %s6
  %s9 = scalar_select 0, %s8, %s6
  loop: start=0, step=1, limit=4
  $region2: #{unet_block_innermost.1} parent=0 // loop_pre_header
    _
  $region3: #{unet_block_innermost.1} parent=0 // loop_header
    %s11 = sphi 0, %s15
    %p12 = scmp.ge.s32.totalorder %s11, 4
    %s21 = sphi 0, %s23
    %s24 = sphi 0, %s21
    %s25 = sphi 0, %s24
    %s41 = sphi 0, %s25
    %s45 = sphi 0, %s45
    %s47 = sphi 0, %s45
    %s48 = sphi 0, %s47
    %s62 = sphi 0, %s48
    %s66 = sphi 0, %s66
    %s68 = sphi 0, %s66
    %s69 = sphi 0, %s68
    %s83 = sphi 0, %s69
    %s87 = sphi 0, %s87
    %s89 = sphi 0, %s87
    %s90 = sphi 0, %s89
    %s104 = sphi 0, %s90
    %s108 = sphi 0, %s108
    %s110 = sphi 0, %s108
    %s111 = sphi 0, %s110
    %s125 = sphi 0, %s111
    %s131 = sphi 0, %s133
    %s134 = sphi 0, %s131
    %s135 = sphi 0, %s134
    %s151 = sphi 0, %s135
  $region4: #{unet_block_innermost.1} parent=0 // loop_header_branch
    %14 = sbr.rel (%p12) target = $region8
  $region5: #{unet_block_innermost.1} parent=0 // loop_body
    %s16 = ssub.s32 %s11, 1
    %s17 = ssub.s32 %s11, 2
    %s18 = sadd.s32 %s11, 1
    %s19 = ssub.s32 %s11, %s18
    %p20 = scmp.eq.s32.totalorder %s19, 0
    %s22 = sadd.s32 %s21, 1
    %s23 = scalar_select %p20, %s21, %s22
    %p26 = pneg %p20
    %p27 = scmp.eq.s32.totalorder %s11, 1
    %p28 = por %p26, %p27
    %p29 = scmp.ne.s32.totalorder %s21, %s24
    %p30 = scmp.eq.s32.totalorder %s11, 0
    %p31 = por %p29, %p30
    %p32 = scmp.ne.s32.totalorder %s21, %s24
    %p33 = scmp.eq.s32.totalorder %s16, 1
    %p34 = por %p32, %p33
    %p35 = scmp.ne.s32.totalorder %s24, %s25
    %p36 = scmp.eq.s32.totalorder %s16, 0
    %p37 = por %p35, %p36
    %p38 = scmp.ne.s32.totalorder %s24, %s25
    %p39 = scmp.eq.s32.totalorder %s17, 1
    %p40 = por %p38, %p39
    %p42 = scmp.ne.s32.totalorder %s25, %s41
    %p43 = scmp.eq.s32.totalorder %s17, 0
    %p44 = por %p42, %p43
    %s46 = sadd.s32 %s45, 1
    %p49 = scmp.eq.s32.totalorder %s11, 1
    %p50 = scmp.ne.s32.totalorder %s45, %s47
    %p51 = scmp.eq.s32.totalorder %s11, 0
    %p52 = por %p50, %p51
    %p53 = scmp.ne.s32.totalorder %s45, %s47
    %p54 = scmp.eq.s32.totalorder %s16, 1
    %p55 = por %p53, %p54
    %p56 = scmp.ne.s32.totalorder %s47, %s48
    %p57 = scmp.eq.s32.totalorder %s16, 0
    %p58 = por %p56, %p57
    %p59 = scmp.ne.s32.totalorder %s47, %s48
    %p60 = scmp.eq.s32.totalorder %s17, 1
    %p61 = por %p59, %p60
    %p63 = scmp.ne.s32.totalorder %s48, %s62
    %p64 = scmp.eq.s32.totalorder %s17, 0
    %p65 = por %p63, %p64
    %s67 = sadd.s32 %s66, 1
    %p70 = scmp.eq.s32.totalorder %s11, 1
    %p71 = scmp.ne.s32.totalorder %s66, %s68
    %p72 = scmp.eq.s32.totalorder %s11, 0
    %p73 = por %p71, %p72
    %p74 = scmp.ne.s32.totalorder %s66, %s68
    %p75 = scmp.eq.s32.totalorder %s16, 1
    %p76 = por %p74, %p75
    %p77 = scmp.ne.s32.totalorder %s68, %s69
    %p78 = scmp.eq.s32.totalorder %s16, 0
    %p79 = por %p77, %p78
    %p80 = scmp.ne.s32.totalorder %s68, %s69
    %p81 = scmp.eq.s32.totalorder %s17, 1
    %p82 = por %p80, %p81
    %p84 = scmp.ne.s32.totalorder %s69, %s83
    %p85 = scmp.eq.s32.totalorder %s17, 0
    %p86 = por %p84, %p85
    %s88 = sadd.s32 %s87, 1
    %p91 = scmp.eq.s32.totalorder %s11, 1
    %p92 = scmp.ne.s32.totalorder %s87, %s89
    %p93 = scmp.eq.s32.totalorder %s11, 0
    %p94 = por %p92, %p93
    %p95 = scmp.ne.s32.totalorder %s87, %s89
    %p96 = scmp.eq.s32.totalorder %s16, 1
    %p97 = por %p95, %p96
    %p98 = scmp.ne.s32.totalorder %s89, %s90
    %p99 = scmp.eq.s32.totalorder %s16, 0
    %p100 = por %p98, %p99
    %p101 = scmp.ne.s32.totalorder %s89, %s90
    %p102 = scmp.eq.s32.totalorder %s17, 1
    %p103 = por %p101, %p102
    %p105 = scmp.ne.s32.totalorder %s90, %s104
    %p106 = scmp.eq.s32.totalorder %s17, 0
    %p107 = por %p105, %p106
    %s109 = sadd.s32 %s108, 1
    %p112 = scmp.eq.s32.totalorder %s11, 1
    %p113 = scmp.ne.s32.totalorder %s108, %s110
    %p114 = scmp.eq.s32.totalorder %s11, 0
    %p115 = por %p113, %p114
    %p116 = scmp.ne.s32.totalorder %s108, %s110
    %p117 = scmp.eq.s32.totalorder %s16, 1
    %p118 = por %p116, %p117
    %p119 = scmp.ne.s32.totalorder %s110, %s111
    %p120 = scmp.eq.s32.totalorder %s16, 0
    %p121 = por %p119, %p120
    %p122 = scmp.ne.s32.totalorder %s110, %s111
    %p123 = scmp.eq.s32.totalorder %s17, 1
    %p124 = por %p122, %p123
    %p126 = scmp.ne.s32.totalorder %s111, %s125
    %p127 = scmp.eq.s32.totalorder %s17, 0
    %p128 = por %p126, %p127
    %s129 = ssub.s32 %s11, %s18
    %p130 = scmp.eq.s32.totalorder %s129, 0
    %s132 = sadd.s32 %s131, 1
    %s133 = scalar_select %p130, %s131, %s132
    %p136 = pneg %p130
    %p137 = scmp.eq.s32.totalorder %s11, 1
    %p138 = por %p136, %p137
    %p139 = scmp.ne.s32.totalorder %s131, %s134
    %p140 = scmp.eq.s32.totalorder %s11, 0
    %p141 = por %p139, %p140
    %p142 = scmp.ne.s32.totalorder %s131, %s134
    %p143 = scmp.eq.s32.totalorder %s16, 1
    %p144 = por %p142, %p143
    %p145 = scmp.ne.s32.totalorder %s134, %s135
    %p146 = scmp.eq.s32.totalorder %s16, 0
    %p147 = por %p145, %p146
    %p148 = scmp.ne.s32.totalorder %s134, %s135
    %p149 = scmp.eq.s32.totalorder %s17, 1
    %p150 = por %p148, %p149
    %p152 = scmp.ne.s32.totalorder %s135, %s151
    %p153 = scmp.eq.s32.totalorder %s17, 0
    %p154 = por %p152, %p153
    %p155 = scmp.le.s32.totalorder 1, %s11
    %p156 = scmp.lt.s32.totalorder %s11, 3
    %p157 = pnand %p155, %p156
    %p158 = pneg %p157
    // Predicated region
    $region9: #{unet_block_innermost.1} parent=5 // pred_check
      _
    $region10: #{unet_block_innermost.1} parent=5 // pred_check_branch
      %160 = sbr.rel (%p157) target = $region12
    $region11: #{unet_block_innermost.1} parent=5 // pred_region
      %s161 = ssub.s32 %s11, 1
      // Predicated region
      $region13: #{unet_block_innermost.1} parent=11 // pred_check
        %p162 = pneg %p58
      $region14: #{unet_block_innermost.1} parent=11 // pred_check_branch
        %164 = sbr.rel (%p162) target = $region16
      $region15: #{unet_block_innermost.1} parent=11 // pred_region
        _
      $region16: #{unet_block_innermost.1} parent=11 // pred_fallthru
        _
      // Predicated region
      $region17: #{unet_block_innermost.1} parent=11 // pred_check
        %p165 = pneg %p79
      $region18: #{unet_block_innermost.1} parent=11 // pred_check_branch
        %167 = sbr.rel (%p165) target = $region20
      $region19: #{unet_block_innermost.1} parent=11 // pred_region
        _
      $region20: #{unet_block_innermost.1} parent=11 // pred_fallthru
        _
      // Predicated region
      $region21: #{unet_block_innermost.1} parent=11 // pred_check
        %p168 = pneg %p100
      $region22: #{unet_block_innermost.1} parent=11 // pred_check_branch
        %170 = sbr.rel (%p168) target = $region24
      $region23: #{unet_block_innermost.1} parent=11 // pred_region
        _
      $region24: #{unet_block_innermost.1} parent=11 // pred_fallthru
        _
      // Predicated region
      $region25: #{unet_block_innermost.1} parent=11 // pred_check
        %p171 = pneg %p121
      $region26: #{unet_block_innermost.1} parent=11 // pred_check_branch
        %173 = sbr.rel (%p171) target = $region28
      $region27: #{unet_block_innermost.1} parent=11 // pred_region
        _
      $region28: #{unet_block_innermost.1} parent=11 // pred_fallthru
        _
    $region12: #{unet_block_innermost.1} parent=5 // pred_fallthru
      _
    %p174 = scmp.lt.s32.totalorder %s11, 2
    // Predicated region
    $region29: #{unet_block_innermost.1} parent=5 // pred_check
      %p175 = pneg %p174
    $region30: #{unet_block_innermost.1} parent=5 // pred_check_branch
      %177 = sbr.rel (%p175) target = $region32
    $region31: #{unet_block_innermost.1} parent=5 // pred_region
      // Predicated region
      $region33: #{unet_block_innermost.1} parent=31 // pred_check
        %p178 = pneg %p31
      $region34: #{unet_block_innermost.1} parent=31 // pred_check_branch
        %180 = sbr.rel (%p178) target = $region36
      $region35: #{unet_block_innermost.1} parent=31 // pred_region
        %p181 = scmp.lt.s32.totalorder %s11, 1
        %s182 = scalar_select %p181, %s11, 1
        %s183 = smul.addr %s182, 4
        %s184 = smul.addr %s183, 2
        %s185 = scalar_lea.vmem %s0, %s184
      $region36: #{unet_block_innermost.1} parent=31 // pred_fallthru
        _
    $region32: #{unet_block_innermost.1} parent=5 // pred_fallthru
      _
    %p186 = scmp.le.s32.totalorder 1, %s11
    %p187 = scmp.lt.s32.totalorder %s11, 3
    %p188 = pnand %p186, %p187
    %p189 = pneg %p188
    // Predicated region
    $region37: #{unet_block_innermost.1} parent=5 // pred_check
      _
    $region38: #{unet_block_innermost.1} parent=5 // pred_check_branch
      %191 = sbr.rel (%p188) target = $region40
    $region39: #{unet_block_innermost.1} parent=5 // pred_region
      %s192 = ssub.s32 %s11, 1
      %p193 = scmp.lt.s32.totalorder %s16, 1
      %s194 = scalar_select %p193, %s16, 1
      %s195 = smul.addr %s194, 4
      %s196 = smul.addr %s195, 2
      %s197 = scalar_lea.vmem %s0, %s196
      %p198 = pneg %p37
      %p199 = pneg %p34
      %p200 = pneg %p58
      %p201 = pneg %p55
      %p202 = pneg %p79
      %p203 = pneg %p76
      %p204 = pneg %p100
      %p205 = pneg %p97
      %p206 = pneg %p121
      %p207 = pneg %p118
      %p208 = pneg %p147
      %p209 = pneg %p144
      %p210 = scmp.lt.s32.totalorder %s16, 1
      %s211 = scalar_select %p210, %s16, 1
      %s212 = smul.addr %s211, 4
      %s213 = smul.addr %s212, 8
      %s214 = scalar_lea.vmem %s5, %s213
      %p215 = scmp.lt.s32.totalorder %s16, 1
      %s216 = scalar_select %p215, %s16, 1
      %s217 = smul.addr %s216, 4
      %s218 = smul.addr %s217, 2
      %s219 = scalar_lea.vmem %s0, %s218
      %p220 = scmp.lt.s32.totalorder %s16, 1
      %s221 = scalar_select %p220, %s16, 1
      %s222 = smul.addr %s221, 4
      %s223 = smul.addr %s222, 8
      %s224 = scalar_lea.vmem %s5, %s223
      %v226 = vld [vmem:[%s219] sm:$0x3]
      %v227 = vunpack.c.l.bf16 %v226
      %vm228 = vcmp.gt.f32.partialorder %v227, 0.0
      %v229 = vmul.f32 %v227, 0.2
      %v230 = vsel %vm228, %v227, %v229
      %v231 = vpack.c.bf16 %v230, %v230
      %s232 = scalar_lea.vmem %s219, 2
      %v233 = vld [vmem:[%s232] sm:$0x3]
      %v234 = vunpack.c.l.bf16 %v233
      %vm235 = vcmp.gt.f32.partialorder %v234, 0.0
      %v236 = vmul.f32 %v234, 0.2
      %v237 = vsel %vm235, %v234, %v236
      %v238 = vpack.c.bf16 %v237, %v237
      %s239 = scalar_lea.vmem %s219, 4
      %v240 = vld [vmem:[%s239] sm:$0x3]
      %v241 = vunpack.c.l.bf16 %v240
      %vm242 = vcmp.gt.f32.partialorder %v241, 0.0
      %v243 = vmul.f32 %v241, 0.2
      %v244 = vsel %vm242, %v241, %v243
      %v245 = vpack.c.bf16 %v244, %v244
      %s246 = scalar_lea.vmem %s219, 6
      %v247 = vld [vmem:[%s246] sm:$0x3]
      %v248 = vunpack.c.l.bf16 %v247
      %vm249 = vcmp.gt.f32.partialorder %v248, 0.0
      %v250 = vmul.f32 %v248, 0.2
      %v251 = vsel %vm249, %v248, %v250
      %v252 = vpack.c.bf16 %v251, %v251
      %v254 = vrot.slane %v231, 6
      %255 = vrot.lane.b32.xlu0 %v254, 127
      %v256 = vpop.permute.xlu0 %255
      %v257 = vrot.slane %v231, 4
      %258 = vrot.lane.b32.xlu0 %v257, 119
      %v259 = vpop.permute.xlu0 %258
      %v260 = vrot.slane %v231, 2
      %261 = vrot.lane.b32.xlu0 %v260, 118
      %v262 = vpop.permute.xlu0 %261
      %v264 = vrot.slane %v238, 6
      %265 = vrot.lane.b32.xlu0 %v264, 127
      %v266 = vpop.permute.xlu0 %265
      %v267 = vrot.slane %v238, 4
      %268 = vrot.lane.b32.xlu0 %v267, 119
      %v269 = vpop.permute.xlu0 %268
      %v270 = vrot.slane %v238, 2
      %271 = vrot.lane.b32.xlu0 %v270, 118
      %v272 = vpop.permute.xlu0 %271
      %v274 = vrot.slane %v245, 6
      %275 = vrot.lane.b32.xlu0 %v274, 127
      %v276 = vpop.permute.xlu0 %275
      %v277 = vrot.slane %v245, 4
      %278 = vrot.lane.b32.xlu0 %v277, 119
      %v279 = vpop.permute.xlu0 %278
      %v280 = vrot.slane %v245, 2
      %281 = vrot.lane.b32.xlu0 %v280, 118
      %v282 = vpop.permute.xlu0 %281
      %v284 = vrot.slane %v252, 6
      %285 = vrot.lane.b32.xlu0 %v284, 127
      %v286 = vpop.permute.xlu0 %285
      %v287 = vrot.slane %v252, 4
      %288 = vrot.lane.b32.xlu0 %v287, 119
      %v289 = vpop.permute.xlu0 %288
      %v290 = vrot.slane %v252, 2
      %291 = vrot.lane.b32.xlu0 %v290, 118
      %v292 = vpop.permute.xlu0 %291
      %vm293 = vcmask 1041408
      %v296 = vsel %vm293, %v231, %v256
      %vm297 = vcmask 1043456
      %v299 = vsel %vm297, %v296, %v259
      %vm300 = vcmask 1045504
      %v302 = vsel %vm300, %v299, %v262
      %v306 = vsel %vm293, %v238, %v266
      %v308 = vsel %vm297, %v306, %v269
      %v310 = vsel %vm300, %v308, %v272
      %v314 = vsel %vm293, %v245, %v276
      %v316 = vsel %vm297, %v314, %v279
      %v318 = vsel %vm300, %v316, %v282
      %v322 = vsel %vm293, %v252, %v286
      %v324 = vsel %vm297, %v322, %v289
      %v326 = vsel %vm300, %v324, %v292
      %v328 = vld [vmem:[%s1] sm:$0xf]
      %v329 = vld [vmem:[%s3] sm:$0xff]
      %331 = vset.pattern.permute.xlu0 0
      %332 = vperm.xlu0 %331, %v329
      %v333 = vpop.permute.xlu0 %332
      %vm335 = vcmask 523264
      %v337 = vsel %vm335, %v328, 0
      %339 = vmatprep.subr.bf16.mxu0 0
      %340 = vmatpush1.bf16.msra.mxu0 0
      %341 = vmatprep.subr.bf16.mxu0 0
      %342 = vmatpush1.bf16.msra.mxu0 0
      %343 = vmatprep.subr.bf16.mxu0 0
      %344 = vmatpush1.bf16.msra.mxu0 0
      %345 = vmatprep.subr.bf16.mxu0 0
      %346 = vmatpush1.bf16.msra.mxu0 0
      %347 = vmatprep.subr.bf16.mxu0 0
      %348 = vmatpush1.bf16.msra.mxu0 %v326
      %349 = vmatprep.subr.bf16.mxu0 0
      %350 = vmatpush1.bf16.msra.mxu0 %v318
      %351 = vmatprep.subr.bf16.mxu0 0
      %352 = vmatpush1.bf16.msra.mxu0 %v310
      %353 = vmatprep.subr.bf16.mxu0 0
      %354 = vmatpush1.bf16.msra.mxu0 %v302
      %355 = vmatprep.subr.bf16.mxu0 0
      %356 = vmatpush2.bf16.msra.mxu0 0
      %357 = vmatprep.subr.bf16.mxu0 0
      %358 = vmatpush2.bf16.msra.mxu0 0
      %359 = vmatprep.subr.bf16.mxu0 0
      %360 = vmatpush2.bf16.msra.mxu0 0
      %361 = vmatprep.subr.bf16.mxu0 0
      %362 = vmatpush2.bf16.msra.mxu0 0
      %363 = vmatprep.subr.bf16.mxu0 0
      %364 = vmatpush2.bf16.msra.mxu0 0
      %365 = vmatprep.subr.bf16.mxu0 0
      %366 = vmatpush2.bf16.msra.mxu0 0
      %367 = vmatprep.subr.bf16.mxu0 0
      %368 = vmatpush2.bf16.msra.mxu0 0
      %369 = vmatprep.subr.bf16.mxu0 0
      %370 = vmatpush2.bf16.msra.mxu0 0
      %371 = vmatprep.mubr.bf16.mxu0 0
      %372 = vmatmul.mubr.bf16.gmra.mxu0 %v337
      %v373 = vpop.f32.mrf.mxu0
      %v374 = vadd.f32 %v333, %v373
      %v375 = vpop.f32.mrf.mxu0
      %v376 = vpop.f32.mrf.mxu0
      %v377 = vpop.f32.mrf.mxu0
      %378 = vdwg.mxu0
      %v379 = vmax.f32 %v374, 0.0
      %v380 = vpack.c.bf16 %v379, %v379
      %382 = vrot.lane.b32.xlu0 %v380, 10
      %v383 = vpop.permute.xlu0 %382
      %vm384 = vcmask 80896
      %v387 = vsel %vm384, 0, %v383
      %vm388 = vcmask 670720
      %v389 = vsel %vm388, %v387, 0
      %v391 = vlaneseq
      %v392 = vand.u32 %v391, 127
      %vm393 = vcmp.lt.s32.totalorder %v392, 0
      %v394 = vsub.s32 0, %v392
      %v395 = vsel %vm393, %v394, %v392
      %v396 = vmul.u32.u64.compose %v395, 3817748708
      %v397 = vextract.low.u32 %v396
      %v398 = vextract.high.u32 %v396
      %v399 = vshrl.u32 %v398, 3
      %v400 = vmul.u32 %v399, 9
      %v401 = vsub.s32 %v395, %v400
      %v402 = vsub.s32 0, %v401
      %v403 = vsel %vm393, %v402, %v401
      %vm404 = vcmp.ne.s32.totalorder %v403, 0
      %vm405 = vcmp.lt.s32.totalorder %v403, 0
      %vm406 = vmand %vm405, %vm404
      %v407 = vadd.s32 %v403, 9
      %v408 = vsel %vm406, %v407, %v403
      %vm409 = vcmp.lt.s32.totalorder %v408, 7
      %v410 = vsel %vm409, 1, 0
      %v411 = vcvt.s32.f32 %v410
      %v412 = vpack.c.bf16 %v411, %v411
      %vm413 = vcmp.ge.s32.totalorder %v408, 1
      %v414 = vsel %vm413, 1, 0
      %v415 = vcvt.s32.f32 %v414
      %v416 = vpack.c.bf16 %v415, %v415
      %v417 = vmul.bf16 %v389, %v416
      %419 = vrot.lane.b32.xlu0 %v412, 2
      %v420 = vpop.permute.xlu0 %419
      %v422 = vmul.bf16 %v389, %v420
      %424 = vrot.lane.b32.xlu0 %v416, 9
      %v425 = vpop.permute.xlu0 %424
      %v427 = vmul.bf16 %v389, %v425
      %428 = vrot.lane.b32.xlu0 %v412, 11
      %v429 = vpop.permute.xlu0 %428
      %v431 = vmul.bf16 %v389, %v429
      %432 = vrot.lane.b32.xlu0 %v416, 18
      %v433 = vpop.permute.xlu0 %432
      %v435 = vmul.bf16 %v389, %v433
      %436 = vrot.lane.b32.xlu0 %v412, 20
      %v437 = vpop.permute.xlu0 %436
      %v439 = vmul.bf16 %v389, %v437
      %v440 = vld [vmem:[%s2] sm:$0x3]
      %v441 = vld [vmem:[%s2 + $0x2] sm:$0x3]
      %v442 = vld [vmem:[%s2 + $0x4] sm:$0x3]
      %v443 = vld [vmem:[%s2 + $0x6] sm:$0x3]
      %v444 = vld [vmem:[%s4] sm:$0xf]
      %v446 = vrot.slane %v427, 4
      %447 = vrot.lane.b32.xlu0 %v446, 1
      %v448 = vpop.permute.xlu0 %447
      %450 = vrot.lane.b32.xlu0 %v389, 9
      %v451 = vpop.permute.xlu0 %450
      %v453 = vrot.slane %v417, 4
      %454 = vrot.lane.b32.xlu0 %v453, 10
      %v455 = vpop.permute.xlu0 %454
      %v457 = vsel %vm297, %v389, %v448
      %v460 = vsel %vm297, %v451, %v455
      %462 = vset.pattern.permute.xlu0 0
      %463 = vperm.xlu0 %462, %v444
      %v464 = vpop.permute.xlu0 %463
      %468 = vrot.lane.b32.xlu0 %v457, 118
      %v469 = vpop.permute.xlu0 %468
      %470 = vrot.lane.b32.xlu0 %v460, 118
      %v471 = vpop.permute.xlu0 %470
      %vm474 = vcmask 261120
      %v476 = vsel %vm474, %v440, 0
      %478 = vmatprep.subr.bf16.mxu0 0
      %479 = vmatpush1.bf16.msra.mxu0 0
      %480 = vmatprep.subr.bf16.mxu0 0
      %481 = vmatpush1.bf16.msra.mxu0 0
      %482 = vmatprep.subr.bf16.mxu0 0
      %483 = vmatpush1.bf16.msra.mxu0 0
      %484 = vmatprep.subr.bf16.mxu0 0
      %485 = vmatpush1.bf16.msra.mxu0 0
      %486 = vmatprep.subr.bf16.mxu0 0
      %487 = vmatpush1.bf16.msra.mxu0 0
      %488 = vmatprep.subr.bf16.mxu0 0
      %489 = vmatpush1.bf16.msra.mxu0 0
      %490 = vmatprep.subr.bf16.mxu0 0
      %491 = vmatpush1.bf16.msra.mxu0 %v471
      %492 = vmatprep.subr.bf16.mxu0 0
      %493 = vmatpush1.bf16.msra.mxu0 %v469
      %494 = vmatprep.subr.bf16.mxu0 0
      %495 = vmatpush2.bf16.msra.mxu0 0
      %496 = vmatprep.subr.bf16.mxu0 0
      %497 = vmatpush2.bf16.msra.mxu0 0
      %498 = vmatprep.subr.bf16.mxu0 0
      %499 = vmatpush2.bf16.msra.mxu0 0
      %500 = vmatprep.subr.bf16.mxu0 0
      %501 = vmatpush2.bf16.msra.mxu0 0
      %502 = vmatprep.subr.bf16.mxu0 0
      %503 = vmatpush2.bf16.msra.mxu0 0
      %504 = vmatprep.subr.bf16.mxu0 0
      %505 = vmatpush2.bf16.msra.mxu0 0
      %506 = vmatprep.subr.bf16.mxu0 0
      %507 = vmatpush2.bf16.msra.mxu0 0
      %508 = vmatprep.subr.bf16.mxu0 0
      %509 = vmatpush2.bf16.msra.mxu0 0
      %510 = vmatprep.mubr.bf16.mxu0 0
      %511 = vmatmul.mubr.bf16.gmra.mxu0 %v476
      %v512 = vpop.f32.mrf.mxu0
      %v513 = vadd.f32 %v464, %v512
      %v514 = vpop.f32.mrf.mxu0
      %v515 = vpop.f32.mrf.mxu0
      %v516 = vpop.f32.mrf.mxu0
      %517 = vdwg.mxu0
      %v519 = vcombine.low %v248, %v248
      %v521 = vsel %vm297, %v513, %v519
      %vm522 = vcmask 588800
      %523 = vst.msk [vmem:[%s224] sm:$0xff] %vm522, %v521
      %v524 = vrot.slane %v389, 4
      %525 = vrot.lane.b32.xlu0 %v524, 1
      %v526 = vpop.permute.xlu0 %525
      %528 = vrot.lane.b32.xlu0 %v422, 9
      %v529 = vpop.permute.xlu0 %528
      %530 = vrot.lane.b32.xlu0 %v524, 10
      %v531 = vpop.permute.xlu0 %530
      %v534 = vsel %vm297, %v431, %v526
      %v537 = vsel %vm297, %v529, %v531
      %540 = vrot.lane.b32.xlu0 %v534, 117
      %v541 = vpop.permute.xlu0 %540
      %542 = vrot.lane.b32.xlu0 %v537, 117
      %v543 = vpop.permute.xlu0 %542
      %v547 = vsel %vm474, %v441, 0
      %549 = vmatprep.subr.bf16.mxu0 0
      %550 = vmatpush1.bf16.msra.mxu0 0
      %551 = vmatprep.subr.bf16.mxu0 0
      %552 = vmatpush1.bf16.msra.mxu0 0
      %553 = vmatprep.subr.bf16.mxu0 0
      %554 = vmatpush1.bf16.msra.mxu0 0
      %555 = vmatprep.subr.bf16.mxu0 0
      %556 = vmatpush1.bf16.msra.mxu0 0
      %557 = vmatprep.subr.bf16.mxu0 0
      %558 = vmatpush1.bf16.msra.mxu0 0
      %559 = vmatprep.subr.bf16.mxu0 0
      %560 = vmatpush1.bf16.msra.mxu0 0
      %561 = vmatprep.subr.bf16.mxu0 0
      %562 = vmatpush1.bf16.msra.mxu0 %v543
      %563 = vmatprep.subr.bf16.mxu0 0
      %564 = vmatpush1.bf16.msra.mxu0 %v541
      %565 = vmatprep.subr.bf16.mxu0 0
      %566 = vmatpush2.bf16.msra.mxu0 0
      %567 = vmatprep.subr.bf16.mxu0 0
      %568 = vmatpush2.bf16.msra.mxu0 0
      %569 = vmatprep.subr.bf16.mxu0 0
      %570 = vmatpush2.bf16.msra.mxu0 0
      %571 = vmatprep.subr.bf16.mxu0 0
      %572 = vmatpush2.bf16.msra.mxu0 0
      %573 = vmatprep.subr.bf16.mxu0 0
      %574 = vmatpush2.bf16.msra.mxu0 0
      %575 = vmatprep.subr.bf16.mxu0 0
      %576 = vmatpush2.bf16.msra.mxu0 0
      %577 = vmatprep.subr.bf16.mxu0 0
      %578 = vmatpush2.bf16.msra.mxu0 0
      %579 = vmatprep.subr.bf16.mxu0 0
      %580 = vmatpush2.bf16.msra.mxu0 0
      %581 = vmatprep.mubr.bf16.mxu0 0
      %582 = vmatmul.mubr.bf16.gmra.mxu0 %v547
      %v583 = vpop.f32.mrf.mxu0
      %v584 = vadd.f32 %v464, %v583
      %v585 = vpop.f32.mrf.mxu0
      %v586 = vpop.f32.mrf.mxu0
      %v587 = vpop.f32.mrf.mxu0
      %588 = vdwg.mxu0
      %v589 = vld [vmem:[%s239] sm:$0x3]
      %v590 = vunpack.c.l.bf16 %v589
      %v592 = vcombine.low %v590, %v590
      %593 = vrot.lane.b32.xlu0 %v592, 127
      %v594 = vpop.permute.xlu0 %593
      %v596 = vsel %vm297, %v584, %v594
      %s597 = scalar_lea.vmem %s224, 8
      %598 = vst.msk [vmem:[%s597] sm:$0xff] %vm522, %v596
      %v600 = vrot.slane %v435, 4
      %601 = vrot.lane.b32.xlu0 %v600, 1
      %v602 = vpop.permute.xlu0 %601
      %603 = vrot.lane.b32.xlu0 %v446, 10
      %v604 = vpop.permute.xlu0 %603
      %v606 = vsel %vm297, %v389, %v602
      %v608 = vsel %vm297, %v451, %v604
      %611 = vrot.lane.b32.xlu0 %v606, 109
      %v612 = vpop.permute.xlu0 %611
      %613 = vrot.lane.b32.xlu0 %v608, 109
      %v614 = vpop.permute.xlu0 %613
      %v618 = vsel %vm474, %v442, 0
      %620 = vmatprep.subr.bf16.mxu0 0
      %621 = vmatpush1.bf16.msra.mxu0 0
      %622 = vmatprep.subr.bf16.mxu0 0
      %623 = vmatpush1.bf16.msra.mxu0 0
      %624 = vmatprep.subr.bf16.mxu0 0
      %625 = vmatpush1.bf16.msra.mxu0 0
      %626 = vmatprep.subr.bf16.mxu0 0
      %627 = vmatpush1.bf16.msra.mxu0 0
      %628 = vmatprep.subr.bf16.mxu0 0
      %629 = vmatpush1.bf16.msra.mxu0 0
      %630 = vmatprep.subr.bf16.mxu0 0
      %631 = vmatpush1.bf16.msra.mxu0 0
      %632 = vmatprep.subr.bf16.mxu0 0
      %633 = vmatpush1.bf16.msra.mxu0 %v614
      %634 = vmatprep.subr.bf16.mxu0 0
      %635 = vmatpush1.bf16.msra.mxu0 %v612
      %636 = vmatprep.subr.bf16.mxu0 0
      %637 = vmatpush2.bf16.msra.mxu0 0
      %638 = vmatprep.subr.bf16.mxu0 0
      %639 = vmatpush2.bf16.msra.mxu0 0
      %640 = vmatprep.subr.bf16.mxu0 0
      %641 = vmatpush2.bf16.msra.mxu0 0
      %642 = vmatprep.subr.bf16.mxu0 0
      %643 = vmatpush2.bf16.msra.mxu0 0
      %644 = vmatprep.subr.bf16.mxu0 0
      %645 = vmatpush2.bf16.msra.mxu0 0
      %646 = vmatprep.subr.bf16.mxu0 0
      %647 = vmatpush2.bf16.msra.mxu0 0
      %648 = vmatprep.subr.bf16.mxu0 0
      %649 = vmatpush2.bf16.msra.mxu0 0
      %650 = vmatprep.subr.bf16.mxu0 0
      %651 = vmatpush2.bf16.msra.mxu0 0
      %652 = vmatprep.mubr.bf16.mxu0 0
      %653 = vmatmul.mubr.bf16.gmra.mxu0 %v618
      %v654 = vpop.f32.mrf.mxu0
      %v655 = vadd.f32 %v464, %v654
      %v656 = vpop.f32.mrf.mxu0
      %v657 = vpop.f32.mrf.mxu0
      %v658 = vpop.f32.mrf.mxu0
      %659 = vdwg.mxu0
      %v660 = vld [vmem:[%s232] sm:$0x3]
      %v661 = vunpack.c.l.bf16 %v660
      %v663 = vcombine.low %v661, %v661
      %664 = vrot.lane.b32.xlu0 %v663, 119
      %v665 = vpop.permute.xlu0 %664
      %v667 = vsel %vm297, %v655, %v665
      %s668 = scalar_lea.vmem %s224, 16
      %669 = vst.msk [vmem:[%s668] sm:$0xff] %vm522, %v667
      %671 = vrot.lane.b32.xlu0 %v431, 9
      %v672 = vpop.permute.xlu0 %671
      %v674 = vsel %vm297, %v439, %v526
      %v676 = vsel %vm297, %v672, %v531
      %679 = vrot.lane.b32.xlu0 %v674, 108
      %v680 = vpop.permute.xlu0 %679
      %681 = vrot.lane.b32.xlu0 %v676, 108
      %v682 = vpop.permute.xlu0 %681
      %v686 = vsel %vm474, %v443, 0
      %688 = vmatprep.subr.bf16.mxu0 0
      %689 = vmatpush1.bf16.msra.mxu0 0
      %690 = vmatprep.subr.bf16.mxu0 0
      %691 = vmatpush1.bf16.msra.mxu0 0
      %692 = vmatprep.subr.bf16.mxu0 0
      %693 = vmatpush1.bf16.msra.mxu0 0
      %694 = vmatprep.subr.bf16.mxu0 0
      %695 = vmatpush1.bf16.msra.mxu0 0
      %696 = vmatprep.subr.bf16.mxu0 0
      %697 = vmatpush1.bf16.msra.mxu0 0
      %698 = vmatprep.subr.bf16.mxu0 0
      %699 = vmatpush1.bf16.msra.mxu0 0
      %700 = vmatprep.subr.bf16.mxu0 0
      %701 = vmatpush1.bf16.msra.mxu0 %v682
      %702 = vmatprep.subr.bf16.mxu0 0
      %703 = vmatpush1.bf16.msra.mxu0 %v680
      %704 = vmatprep.subr.bf16.mxu0 0
      %705 = vmatpush2.bf16.msra.mxu0 0
      %706 = vmatprep.subr.bf16.mxu0 0
      %707 = vmatpush2.bf16.msra.mxu0 0
      %708 = vmatprep.subr.bf16.mxu0 0
      %709 = vmatpush2.bf16.msra.mxu0 0
      %710 = vmatprep.subr.bf16.mxu0 0
      %711 = vmatpush2.bf16.msra.mxu0 0
      %712 = vmatprep.subr.bf16.mxu0 0
      %713 = vmatpush2.bf16.msra.mxu0 0
      %714 = vmatprep.subr.bf16.mxu0 0
      %715 = vmatpush2.bf16.msra.mxu0 0
      %716 = vmatprep.subr.bf16.mxu0 0
      %717 = vmatpush2.bf16.msra.mxu0 0
      %718 = vmatprep.subr.bf16.mxu0 0
      %719 = vmatpush2.bf16.msra.mxu0 0
      %720 = vmatprep.mubr.bf16.mxu0 0
      %721 = vmatmul.mubr.bf16.gmra.mxu0 %v686
      %v722 = vpop.f32.mrf.mxu0
      %v723 = vadd.f32 %v464, %v722
      %v724 = vpop.f32.mrf.mxu0
      %v725 = vpop.f32.mrf.mxu0
      %v726 = vpop.f32.mrf.mxu0
      %727 = vdwg.mxu0
      %v728 = vld [vmem:[%s219] sm:$0x3]
      %v729 = vunpack.c.l.bf16 %v728
      %v731 = vcombine.low %v729, %v729
      %732 = vrot.lane.b32.xlu0 %v731, 118
      %v733 = vpop.permute.xlu0 %732
      %v735 = vsel %vm297, %v723, %v733
      %s736 = scalar_lea.vmem %s224, 24
      %737 = vst.msk [vmem:[%s736] sm:$0xff] %vm522, %v735
      %p738 = scmp.lt.s32.totalorder %s16, 1
      %s739 = scalar_select %p738, %s16, 1
      %s740 = smul.addr %s739, 4
      %s741 = smul.addr %s740, 8
      %s742 = scalar_lea.vmem %s5, %s741
      // Predicated region
      $region41: #{unet_block_innermost.1} parent=39 // pred_check
        %p743 = pneg %p144
      $region42: #{unet_block_innermost.1} parent=39 // pred_check_branch
        %745 = sbr.rel (%p743) target = $region44
      $region43: #{unet_block_innermost.1} parent=39 // pred_region
        _
      $region44: #{unet_block_innermost.1} parent=39 // pred_fallthru
        _
    $region40: #{unet_block_innermost.1} parent=5 // pred_fallthru
      _
    %p746 = scmp.le.s32.totalorder 2, %s11
    // Predicated region
    $region45: #{unet_block_innermost.1} parent=5 // pred_check
      %p747 = pneg %p746
    $region46: #{unet_block_innermost.1} parent=5 // pred_check_branch
      %749 = sbr.rel (%p747) target = $region48
    $region47: #{unet_block_innermost.1} parent=5 // pred_region
      %s750 = ssub.s32 %s11, 2
      // Predicated region
      $region49: #{unet_block_innermost.1} parent=47 // pred_check
        %p751 = pneg %p150
      $region50: #{unet_block_innermost.1} parent=47 // pred_check_branch
        %753 = sbr.rel (%p751) target = $region52
      $region51: #{unet_block_innermost.1} parent=47 // pred_region
        %p754 = scmp.lt.s32.totalorder %s17, 1
        %s755 = scalar_select %p754, %s17, 1
        %s756 = smul.addr %s755, 4
        %s757 = smul.addr %s756, 8
        %s758 = scalar_lea.vmem %s5, %s757
      $region52: #{unet_block_innermost.1} parent=47 // pred_fallthru
        _
    $region48: #{unet_block_innermost.1} parent=5 // pred_fallthru
      _
  $region6: #{unet_block_innermost.1} parent=0 // loop_footer
    %s15 = sadd.s32 1, %s11
  $region7: #{unet_block_innermost.1} parent=0 // loop_footer_branch
    %10 = sbr.rel target = $region3
  $region8: #{unet_block_innermost.1} parent=0 // loop_exit
    _

</llo_original>
